<compile_context>
chip_gen: v6e
topology: v6e:2x2x1
jax: 0.10.0
libtpu: 0.0.40
codegen_flags: <defaults>
</compile_context>

<pallas_src>
import jax
import jax.numpy as jnp
from jax.experimental import pallas as pl
from jax.experimental.pallas import tpu as pltpu


def _log_kernel(x_ref, o_ref):
    # Elementwise natural log; exp/log run on the EUP, whole tile at once.
    o_ref[...] = jnp.log(x_ref[...])


_LANE = 128
# ~2 MiB per block: measured streaming kernels hit the ~85% HBM-roofline plateau
# here, and 4 double-buffered 2 MiB buffers (in+out) fit every generation's
# scoped-VMEM default (v5e: 16 MiB) without touching vmem_limit_bytes.
_TARGET_BLOCK_BYTES = 2 * 1024 * 1024


def _sublane_multiple(dtype) -> int:
    # (8,128) tiling: 8 sublanes for 32-bit, 16 for 16-bit, 32 for 8-bit dtypes.
    itemsize = jnp.dtype(dtype).itemsize
    return max(8, 32 // max(itemsize, 1))


def _pick_cols(n: int) -> int:
    # Widest lane-dense column count that divides n exactly (no padding needed).
    for cols in (4096, 2048, 1024, 512, 256, 128):
        if n % cols == 0:
            return cols
    return 0  # n is not a multiple of 128 -> minimal-pad fallback.


def pallas_log(x: jax.Array) -> jax.Array:
    """Elementwise natural logarithm computed in a Pallas TPU kernel."""
    orig_shape = x.shape
    # torch.log promotes integer inputs to floating point.
    if not jnp.issubdtype(x.dtype, jnp.floating):
        x = x.astype(jnp.float32)
    dtype = x.dtype
    itemsize = jnp.dtype(dtype).itemsize
    n = x.size

    if n == 0:
        return jnp.reshape(x, orig_shape)

    x_flat = jnp.reshape(x, (-1,))
    cols = _pick_cols(n)
    padded = 0
    if cols == 0:
        # Rare fallback (element count not a multiple of 128): pad minimally
        # with 1.0 so log() stays finite; padded values are discarded below.
        cols = _LANE
        n_pad = pl.cdiv(n, cols) * cols
        padded = n_pad - n
        x_flat = jnp.concatenate(
            [x_flat, jnp.ones((padded,), dtype=dtype)], axis=0
        )
        n = n_pad

    rows = n // cols
    x2d = jnp.reshape(x_flat, (rows, cols))

    sub = _sublane_multiple(dtype)
    # Rows per block targeting ~_TARGET_BLOCK_BYTES, rounded down to the
    # required sublane multiple (never below it).
    tile_rows = max(sub, (_TARGET_BLOCK_BYTES // (cols * itemsize)) // sub * sub)

    if rows <= tile_rows:
        # Fast path: whole slab in one block (full-array block shape is always
        # legal regardless of the (8,128) divisibility constraint).
        block_rows = rows
        grid = (1,)
    else:
        block_rows = tile_rows
        # Partial edge block (if any) is masked by Pallas on the row axis.
        grid = (pl.cdiv(rows, tile_rows),)

    cost = pl.CostEstimate(
        flops=0,
        transcendentals=n,
        bytes_accessed=2 * n * itemsize,
    )

    out2d = pl.pallas_call(
        _log_kernel,
        out_shape=jax.ShapeDtypeStruct((rows, cols), dtype),
        grid_spec=pltpu.PrefetchScalarGridSpec(
            num_scalar_prefetch=0,
            grid=grid,
            in_specs=[pl.BlockSpec((block_rows, cols), lambda i: (i, 0))],
            out_specs=pl.BlockSpec((block_rows, cols), lambda i: (i, 0)),
        ),
        compiler_params=pltpu.CompilerParams(
            dimension_semantics=("parallel",),
        ),
        cost_estimate=cost,
    )(x2d)

    out_flat = jnp.reshape(out2d, (-1,))
    if padded:
        out_flat = out_flat[: n - padded]
    return jnp.reshape(out_flat, orig_shape)


if __name__ == "__main__":
    key = jax.random.PRNGKey(0)

    # Small NCHW input, strictly positive so log is well-defined (matches torch.log).
    x = jax.random.uniform(
        key, (2, 4, 16, 16), dtype=jnp.float32, minval=0.1, maxval=10.0
    )
    y = pallas_log(x)
    jax.block_until_ready(y)
    y_ref = jnp.log(x)
    assert y.shape == x.shape and y.dtype == x.dtype
    assert jnp.allclose(y, y_ref, rtol=1e-6, atol=1e-6)

    # Odd-sized input exercises the minimal-pad fallback path.
    x_odd = jax.random.uniform(
        jax.random.PRNGKey(1), (3, 5, 7), dtype=jnp.float32, minval=0.1, maxval=10.0
    )
    y_odd = pallas_log(x_odd)
    jax.block_until_ready(y_odd)
    assert y_odd.shape == x_odd.shape
    assert jnp.allclose(y_odd, jnp.log(x_odd), rtol=1e-6, atol=1e-6)

    print("KERNEL_OK")
</pallas_src>

<mosaic_0001>
module attributes {stable_mosaic.version = 11 : i64} {
  func.func @_log_kernel(%arg0: i32, %arg1: memref<1x2048xf32, #tpu.memory_space<vmem>>, %arg2: memref<1x2048xf32, #tpu.memory_space<vmem>>) attributes {dimension_semantics = [#tpu.dimension_semantics<parallel>], iteration_bounds = array<i64: 1>, scalar_prefetch = 0 : i64, scratch_operands = 0 : i64, tpu.core_type = #tpu.core_type<tc>, window_params = [{transform_indices = @transform_0, window_bounds = array<i64: 1, 2048>}, {transform_indices = @transform_1, window_bounds = array<i64: 1, 2048>}]} {
    %c0 = arith.constant 0 : index
    %c0_0 = arith.constant 0 : index
    %0 = vector.load %arg1[%c0, %c0_0] : memref<1x2048xf32, #tpu.memory_space<vmem>>, vector<1x2048xf32>
    %1 = math.log %0 : vector<1x2048xf32>
    %c0_1 = arith.constant 0 : index
    %c0_2 = arith.constant 0 : index
    %2 = vector.load %arg2[%c0_1, %c0_2] : memref<1x2048xf32, #tpu.memory_space<vmem>>, vector<1x2048xf32>
    tpu.vector_store %arg2[%c0_1, %c0_2], %1 {strides = array<i32>} : memref<1x2048xf32, #tpu.memory_space<vmem>>, vector<1x2048xf32>,
    return
  }
  func.func @transform_0(%arg0: i32) -> (i32, i32) {
    %c0_i32 = arith.constant 0 : i32
    %c0_i32_0 = arith.constant 0 : i32
    return %arg0, %c0_i32 : i32, i32
  }
  func.func @transform_1(%arg0: i32) -> (i32, i32) {
    %c0_i32 = arith.constant 0 : i32
    %c0_i32_0 = arith.constant 0 : i32
    return %arg0, %c0_i32 : i32, i32
  }
}

</mosaic_0001>

<llo_original>
// kernel: tpu_custom_call.1
$region0: #{tpu_custom_call.1}
  #allocation0 [shape = 'u32[]', space=smem, size = 0x4, offset = 0x4, fixed_abs, tag = 'smem constant byte address 0x4 - core index']
  #allocation1 [shape = 'u32[144,128]{1,0:T(1,128)}', space=vmem, size = 0x12000, scoped, tag = 'internal scratch']
  %s0 = inlined_call_operand.hbm [shape: f32[1,2048], index: 0, kind: input, shape index: {}]
  %s1 = inlined_call_operand.hbm [shape: f32[1,2048], index: 1, kind: output, shape index: {}]
  %s2 = sld [smem:[#allocation0]]
  $region18: #{tpu_custom_call.1} parent=0
    _
  %s4 = ssub.s32 1, %s2
  %s5 = scalar_select 0, %s4, %s2
  $region1: #{tpu_custom_call.1} parent=0
    #allocation2 [shape = 'u8[8192]{0}', space=vmem, size = 0x2000, scoped, tag = 'input window, operand 0, single buffered']
    #allocation3 [shape = 's32[1]{0}', space=sflag, size = 0x4, scoped, tag = 'scoped memory for tpu_custom_call.1']
    #allocation4 [shape = 's32[1]{0}', space=sflag, size = 0x4, scoped, tag = 'scoped memory for tpu_custom_call.1']
    #allocation5 [shape = 'u8[8192]{0}', space=vmem, size = 0x2000, scoped, tag = 'output window, operand 0, single buffered']
    %6 = vsyncpa [#allocation3], 0
    %7 = vsyncpa [#allocation4], 0
    // Predicated region
    $region2: #{tpu_custom_call.1} parent=1 // pred_check
      _
    $region3: #{tpu_custom_call.1} parent=1 // pred_check_branch
      %9 = sbr.rel (0) target = $region5
    $region4: #{tpu_custom_call.1} parent=1 // pred_region
      %s11 = ssub.s32 256, 256
      %12 = vsyncadd [#allocation3], %s11
      %s14 = sshll.u32 [#allocation2], 4
      %s15 = int_to_ptr.vmem [resolvable:$true] %s14
      %17 = dma.hbm_to_vmem [thread:$0]  %s0, 256, %s15, [#allocation3]
    $region5: #{tpu_custom_call.1} parent=1 // pred_fallthru
      _
    // Predicated region
    $region6: #{tpu_custom_call.1} parent=1 // pred_check
      _
    $region7: #{tpu_custom_call.1} parent=1 // pred_check_branch
      %19 = sbr.rel (0) target = $region9
    $region8: #{tpu_custom_call.1} parent=1 // pred_region
      %20 = dma.done [#allocation3], 256
    $region9: #{tpu_custom_call.1} parent=1 // pred_fallthru
      _
    %v21 = vld [vmem:[#allocation2] sm:$0xff]
    %v22 = vld [vmem:[#allocation2 + $0x8] sm:$0xff]
    %v23 = vlog2.pop %v21
    %v24 = vmul.f32 %v23, 0.6931472
    %v25 = vlog2.pop %v22
    %v26 = vmul.f32 %v25, 0.6931472
    %27 = vst [vmem:[#allocation5] sm:$0xff] %v24
    %28 = vst [vmem:[#allocation5 + $0x8] sm:$0xff] %v26
    // Predicated region
    $region10: #{tpu_custom_call.1} parent=1 // pred_check
      _
    $region11: #{tpu_custom_call.1} parent=1 // pred_check_branch
      %30 = sbr.rel (0) target = $region13
    $region12: #{tpu_custom_call.1} parent=1 // pred_region
      %s32 = ssub.s32 256, 256
      %33 = vsyncadd [#allocation4], %s32
      %s35 = sshll.u32 [#allocation5], 4
      %s36 = int_to_ptr.vmem [resolvable:$true] %s35
      %38 = dma.vmem_to_hbm [thread:$0]  %s36, 256, %s1, [#allocation4]
    $region13: #{tpu_custom_call.1} parent=1 // pred_fallthru
      _
    // Predicated region
    $region14: #{tpu_custom_call.1} parent=1 // pred_check
      _
    $region15: #{tpu_custom_call.1} parent=1 // pred_check_branch
      %40 = sbr.rel (0) target = $region17
    $region16: #{tpu_custom_call.1} parent=1 // pred_region
      %41 = dma.done [#allocation4], 256
    $region17: #{tpu_custom_call.1} parent=1 // pred_fallthru
      _
    %42 = vsyncpa [#allocation3], 1
    %43 = vsyncpa [#allocation4], 1

</llo_original>
